<compile_context>
chip_gen: v7x
topology: tpu7x:2x2x1
jax: 0.10.0
libtpu: 0.0.40
codegen_flags: <defaults>
</compile_context>

<pallas_src>
import numpy as np
import jax
import jax.numpy as jnp
from jax import lax
from jax.experimental import pallas as pl
from jax.experimental.pallas import tpu as pltpu

SIGMA = 0.1

_GOLDEN = np.uint32(0x9E3779B9)
_MIX_C1 = np.uint32(0x7FEB352D)
_MIX_C2 = np.uint32(0x846CA68B)
_INV_2P23 = np.float32(1.0 / (1 << 23))
_TWO_PI = np.float32(2.0 * np.pi)


def _mix32(v):
    """lowbias32 integer hash (uint32 -> uint32), pure VPU int ops."""
    v = v ^ (v >> 16)
    v = v * _MIX_C1
    v = v ^ (v >> 15)
    v = v * _MIX_C2
    v = v ^ (v >> 16)
    return v


def _make_kernel(sigma, block_rows, lane):
    half = lane // 2
    sigma = np.float32(sigma)

    def gaussian_noise_kernel(seed_ref, x_ref, o_ref):
        # Global pair-counter: unique per (global row, half-column) across the whole
        # grid -> tiles and TensorCores never reuse a counter (no correlated noise).
        row0 = pl.program_id(0) * block_rows
        r_iota = lax.broadcasted_iota(jnp.int32, (block_rows, half), 0) + row0
        c_iota = lax.broadcasted_iota(jnp.int32, (block_rows, half), 1)
        pair = (r_iota * half + c_iota).astype(jnp.uint32)

        seed_u = seed_ref[0].astype(jnp.uint32)
        seed_term = (seed_u + np.uint32(1)) * _GOLDEN

        pair2 = pair * np.uint32(2)
        c0 = _mix32(pair2 ^ seed_term)
        c1 = _mix32((pair2 + np.uint32(1)) ^ seed_term)

        # Box-Muller: two independent N(0,1) per uniform pair (use BOTH cos and sin).
        u1 = ((c0 >> 9).astype(jnp.int32).astype(jnp.float32) + 0.5) * _INV_2P23  # (0,1)
        u2 = (c1 >> 9).astype(jnp.int32).astype(jnp.float32) * _INV_2P23          # [0,1)
        r = jnp.sqrt(-2.0 * jnp.log(u1))
        th = _TWO_PI * u2
        eps = jnp.concatenate([r * jnp.cos(th), r * jnp.sin(th)], axis=-1)  # (BR, lane)

        # out = x * (1 + sigma * eps); scale computed in f32, multiplied in x's dtype
        # (no f32 shadow copy of the x tile for bf16 inputs).
        scale = (1.0 + sigma * eps).astype(x_ref.dtype)
        o_ref[...] = x_ref[...] * scale

    return gaussian_noise_kernel


def gaussian_noise_forward(x, seed, *, sigma=SIGMA, training=True,
                           noise_at_inference=False):
    """GaussianNoiseBlock.forward. x: any float array; returns same shape/dtype."""
    if not (training or noise_at_inference) or sigma == 0.0:
        return x

    orig_shape, orig_dtype = x.shape, x.dtype
    total = int(x.size)
    flat = x.reshape(-1)

    # Lane-dense slab: widest multiple-of-128 lane dim the element count allows,
    # preferring >= 8 rows so sublanes are also dense. Pad if not a multiple of 128.
    lane = None
    for cand in (1024, 512, 256, 128):
        if total % cand == 0 and total // cand >= 8:
            lane = cand
            break
    if lane is None:
        for cand in (1024, 512, 256, 128):
            if total % cand == 0:
                lane = cand
                break
    padded = total
    if lane is None:
        lane = 128
        padded = ((total + lane - 1) // lane) * lane
        flat = jnp.pad(flat, (0, padded - total))
    rows = padded // lane
    x2 = flat.reshape(rows, lane)

    # ~1 MiB f32 blocks (measured ~85% of HBM roofline for elementwise kernels),
    # multiple of 8 rows; small inputs take the whole slab in a single grid step.
    # Double-buffered in+out blocks stay well under v5e/v7x scoped-VMEM budgets.
    target_elems = 512 * 512
    block_rows = rows if rows <= max(8, target_elems // lane) else target_elems // lane
    grid = (pl.cdiv(rows, block_rows),)

    seed_arr = jnp.asarray([seed], dtype=jnp.int32)

    out2 = pl.pallas_call(
        _make_kernel(float(sigma), block_rows, lane),
        out_shape=jax.ShapeDtypeStruct((rows, lane), orig_dtype),
        grid_spec=pltpu.PrefetchScalarGridSpec(
            num_scalar_prefetch=1,                     # seed -> SMEM
            grid=grid,
            in_specs=[pl.BlockSpec((block_rows, lane), lambda i, seed: (i, 0))],
            out_specs=pl.BlockSpec((block_rows, lane), lambda i, seed: (i, 0)),
        ),
        input_output_aliases={1: 0},                   # donate x's HBM buffer to out
        compiler_params=pltpu.CompilerParams(
            dimension_semantics=("parallel",),         # megacore-shard rows on v7x
            vmem_limit_bytes=32 * 1024 * 1024,
        ),
    )(seed_arr, x2)

    out_flat = out2.reshape(-1)
    if padded != total:
        out_flat = out_flat[:total]
    return out_flat.reshape(orig_shape)


if __name__ == "__main__":
    key = jax.random.PRNGKey(0)
    x = jax.random.normal(key, (2, 4, 16, 16), jnp.float32)   # NCHW, like the module

    out = gaussian_noise_forward(x, seed=0, training=True)
    out = jax.block_until_ready(out)

    # shape / dtype / finiteness
    assert out.shape == x.shape and out.dtype == x.dtype
    assert bool(jnp.all(jnp.isfinite(out)))

    # implied eps = (out - x) / (sigma * x) should look like N(0, 1)
    mask = jnp.abs(x) > 1e-3
    eps = ((out - x) / (SIGMA * x))[mask]
    m, s = float(jnp.mean(eps)), float(jnp.std(eps))
    assert abs(m) < 0.15, f"noise mean off: {m}"
    assert 0.8 < s < 1.2, f"noise std off: {s}"

    # eval mode (no noise_at_inference) must be the identity
    out_eval = gaussian_noise_forward(x, seed=0, training=False)
    assert bool(jnp.array_equal(out_eval, x))

    # different seeds -> different noise
    out_b = gaussian_noise_forward(x, seed=1, training=True)
    assert not bool(jnp.array_equal(out, out_b))

    print("KERNEL_OK")
</pallas_src>

<mosaic_0001>
module attributes {stable_mosaic.version = 11 : i64} {
  func.func @gaussian_noise_kernel(%arg0: i32, %arg1: memref<1xi32, #tpu.memory_space<smem>>, %arg2: memref<8x256xf32, #tpu.memory_space<vmem>>, %arg3: memref<8x256xf32, #tpu.memory_space<vmem>>) attributes {dimension_semantics = [#tpu.dimension_semantics<parallel>], iteration_bounds = array<i64: 1>, scalar_prefetch = 1 : i64, scratch_operands = 0 : i64, tpu.core_type = #tpu.core_type<tc>, window_params = [{transform_indices = @transform_0, window_bounds = array<i64: 8, 256>}, {transform_indices = @transform_1, window_bounds = array<i64: 8, 256>}]} {
    %c8_i32 = arith.constant 8 : i32
    %0 = arith.muli %arg0, %c8_i32 : i32
    %1 = tpu.iota {dimensions = array<i32: 0>} : vector<8x128xi32>
    %2 = vector.broadcast %0 : i32 to vector<8x128xi32>
    %3 = arith.addi %1, %2 : vector<8x128xi32>
    %4 = tpu.iota {dimensions = array<i32: 1>} : vector<8x128xi32>
    %c128_i32 = arith.constant 128 : i32
    %5 = vector.broadcast %c128_i32 : i32 to vector<8x128xi32>
    %6 = arith.muli %3, %5 : vector<8x128xi32>
    %7 = arith.addi %6, %4 : vector<8x128xi32>
    %c0 = arith.constant 0 : index
    %8 = memref.load %arg1[%c0] : memref<1xi32, #tpu.memory_space<smem>>
    %c1_i32 = arith.constant 1 : i32
    %9 = arith.addi %8, %c1_i32 : i32
    %c-1640531527_i32 = arith.constant -1640531527 : i32
    %10 = arith.muli %9, %c-1640531527_i32 : i32
    %c2_i32 = arith.constant 2 : i32
    %11 = vector.broadcast %c2_i32 : i32 to vector<8x128xi32>
    %12 = arith.muli %7, %11 : vector<8x128xi32>
    %13 = vector.broadcast %10 : i32 to vector<8x128xi32>
    %14 = arith.xori %12, %13 : vector<8x128xi32>
    %c16_i32 = arith.constant 16 : i32
    %15 = vector.broadcast %c16_i32 : i32 to vector<8x128xi32>
    %16 = arith.shrui %14, %15 : vector<8x128xi32>
    %17 = arith.xori %14, %16 : vector<8x128xi32>
    %c2146121005_i32 = arith.constant 2146121005 : i32
    %18 = vector.broadcast %c2146121005_i32 : i32 to vector<8x128xi32>
    %19 = arith.muli %17, %18 : vector<8x128xi32>
    %c15_i32 = arith.constant 15 : i32
    %20 = vector.broadcast %c15_i32 : i32 to vector<8x128xi32>
    %21 = arith.shrui %19, %20 : vector<8x128xi32>
    %22 = arith.xori %19, %21 : vector<8x128xi32>
    %c-2073254261_i32 = arith.constant -2073254261 : i32
    %23 = vector.broadcast %c-2073254261_i32 : i32 to vector<8x128xi32>
    %24 = arith.muli %22, %23 : vector<8x128xi32>
    %c16_i32_0 = arith.constant 16 : i32
    %25 = vector.broadcast %c16_i32_0 : i32 to vector<8x128xi32>
    %26 = arith.shrui %24, %25 : vector<8x128xi32>
    %27 = arith.xori %24, %26 : vector<8x128xi32>
    %c1_i32_1 = arith.constant 1 : i32
    %28 = vector.broadcast %c1_i32_1 : i32 to vector<8x128xi32>
    %29 = arith.addi %12, %28 : vector<8x128xi32>
    %30 = vector.broadcast %10 : i32 to vector<8x128xi32>
    %31 = arith.xori %29, %30 : vector<8x128xi32>
    %c16_i32_2 = arith.constant 16 : i32
    %32 = vector.broadcast %c16_i32_2 : i32 to vector<8x128xi32>
    %33 = arith.shrui %31, %32 : vector<8x128xi32>
    %34 = arith.xori %31, %33 : vector<8x128xi32>
    %c2146121005_i32_3 = arith.constant 2146121005 : i32
    %35 = vector.broadcast %c2146121005_i32_3 : i32 to vector<8x128xi32>
    %36 = arith.muli %34, %35 : vector<8x128xi32>
    %c15_i32_4 = arith.constant 15 : i32
    %37 = vector.broadcast %c15_i32_4 : i32 to vector<8x128xi32>
    %38 = arith.shrui %36, %37 : vector<8x128xi32>
    %39 = arith.xori %36, %38 : vector<8x128xi32>
    %c-2073254261_i32_5 = arith.constant -2073254261 : i32
    %40 = vector.broadcast %c-2073254261_i32_5 : i32 to vector<8x128xi32>
    %41 = arith.muli %39, %40 : vector<8x128xi32>
    %c16_i32_6 = arith.constant 16 : i32
    %42 = vector.broadcast %c16_i32_6 : i32 to vector<8x128xi32>
    %43 = arith.shrui %41, %42 : vector<8x128xi32>
    %44 = arith.xori %41, %43 : vector<8x128xi32>
    %c9_i32 = arith.constant 9 : i32
    %45 = vector.broadcast %c9_i32 : i32 to vector<8x128xi32>
    %46 = arith.shrui %27, %45 : vector<8x128xi32>
    %47 = arith.sitofp %46 : vector<8x128xi32> to vector<8x128xf32>
    %cst = arith.constant 5.000000e-01 : f32
    %48 = vector.broadcast %cst : f32 to vector<8x128xf32>
    %49 = arith.addf %47, %48 : vector<8x128xf32>
    %cst_7 = arith.constant 1.1920929E-7 : f32
    %50 = vector.broadcast %cst_7 : f32 to vector<8x128xf32>
    %51 = arith.mulf %49, %50 : vector<8x128xf32>
    %c9_i32_8 = arith.constant 9 : i32
    %52 = vector.broadcast %c9_i32_8 : i32 to vector<8x128xi32>
    %53 = arith.shrui %44, %52 : vector<8x128xi32>
    %54 = arith.sitofp %53 : vector<8x128xi32> to vector<8x128xf32>
    %cst_9 = arith.constant 1.1920929E-7 : f32
    %55 = vector.broadcast %cst_9 : f32 to vector<8x128xf32>
    %56 = arith.mulf %54, %55 : vector<8x128xf32>
    %57 = math.log %51 : vector<8x128xf32>
    %cst_10 = arith.constant -2.000000e+00 : f32
    %58 = vector.broadcast %cst_10 : f32 to vector<8x128xf32>
    %59 = arith.mulf %58, %57 : vector<8x128xf32>
    %60 = math.sqrt %59 : vector<8x128xf32>
    %cst_11 = arith.constant 6.28318548 : f32
    %61 = vector.broadcast %cst_11 : f32 to vector<8x128xf32>
    %62 = arith.mulf %61, %56 : vector<8x128xf32>
    %63 = math.cos %62 : vector<8x128xf32>
    %64 = arith.mulf %60, %63 : vector<8x128xf32>
    %65 = math.sin %62 : vector<8x128xf32>
    %66 = arith.mulf %60, %65 : vector<8x128xf32>
    %67 = tpu.concatenate %64, %66 in 1 : vector<8x128xf32>, vector<8x128xf32> -> vector<8x256xf32>
    %cst_12 = arith.constant 1.000000e-01 : f32
    %68 = vector.broadcast %cst_12 : f32 to vector<8x256xf32>
    %69 = arith.mulf %68, %67 : vector<8x256xf32>
    %cst_13 = arith.constant 1.000000e+00 : f32
    %70 = vector.broadcast %cst_13 : f32 to vector<8x256xf32>
    %71 = arith.addf %70, %69 : vector<8x256xf32>
    %c0_14 = arith.constant 0 : index
    %c0_15 = arith.constant 0 : index
    %72 = vector.load %arg2[%c0_14, %c0_15] : memref<8x256xf32, #tpu.memory_space<vmem>>, vector<8x256xf32>
    %73 = arith.mulf %72, %71 : vector<8x256xf32>
    %c0_16 = arith.constant 0 : index
    %c0_17 = arith.constant 0 : index
    %74 = vector.load %arg3[%c0_16, %c0_17] : memref<8x256xf32, #tpu.memory_space<vmem>>, vector<8x256xf32>
    tpu.vector_store %arg3[%c0_16, %c0_17], %73 {strides = array<i32>} : memref<8x256xf32, #tpu.memory_space<vmem>>, vector<8x256xf32>,
    return
  }
  func.func @transform_0(%arg0: i32, %arg1: memref<1xi32, #tpu.memory_space<smem>>) -> (i32, i32) {
    %c0_i32 = arith.constant 0 : i32
    %c0_i32_0 = arith.constant 0 : i32
    return %arg0, %c0_i32 : i32, i32
  }
  func.func @transform_1(%arg0: i32, %arg1: memref<1xi32, #tpu.memory_space<smem>>) -> (i32, i32) {
    %c0_i32 = arith.constant 0 : i32
    %c0_i32_0 = arith.constant 0 : i32
    return %arg0, %c0_i32 : i32, i32
  }
}

</mosaic_0001>

<llo_original>
// kernel: tpu_custom_call.1
$region0: #{tpu_custom_call.1}
  #allocation0 [shape = 'u32[]', space=smem, size = 0x4, offset = 0x4, fixed_abs, tag = 'smem constant byte address 0x4 - core index']
  #allocation1 [shape = 'u32[144,128]{1,0:T(1,128)}', space=vmem, size = 0x12000, scoped, tag = 'internal scratch']
  #allocation2 [shape = 's32[1]{0}', space=sflag, size = 0x4, scoped, tag = 'scoped memory for tpu_custom_call.1']
  #allocation3 [shape = 's32[1]{0:T(128)S(6)}', space=smem, size = 0x200, scoped, tag = 'prefetched SMEM operand 0']
  %s0 = inlined_call_operand.<no memory space> [shape: s32[1], index: 0, kind: input, shape index: {}]
  %s1 = inlined_call_operand.hbm [shape: f32[8,256], index: 1, kind: input, shape index: {}, may-alias: {1,2}]
  %s2 = inlined_call_operand.hbm [shape: f32[8,256], index: 2, kind: output, shape index: {}, may-alias: {1,2}]
  %s3 = sld [smem:[#allocation0]]
  $region18: #{tpu_custom_call.1} parent=0
    _
  %s5 = ssub.s32 1, %s3
  %s6 = scalar_select 0, %s5, %s3
  %7 = sst [smem:[#allocation3]] %s0
  $region1: #{tpu_custom_call.1} parent=0
    #allocation4 [shape = 'u8[8192]{0}', space=vmem, size = 0x2000, scoped, tag = 'input window, operand 1, single buffered']
    #allocation5 [shape = 's32[1]{0}', space=sflag, size = 0x4, scoped, tag = 'scoped memory for tpu_custom_call.1']
    #allocation6 [shape = 's32[1]{0}', space=sflag, size = 0x4, scoped, tag = 'scoped memory for tpu_custom_call.1']
    #allocation7 [shape = 'u8[8192]{0}', space=vmem, size = 0x2000, scoped, tag = 'output window, operand 0, single buffered']
    %8 = vsyncpa [#allocation5], 0
    %9 = vsyncpa [#allocation6], 0
    // Predicated region
    $region2: #{tpu_custom_call.1} parent=1 // pred_check
      _
    $region3: #{tpu_custom_call.1} parent=1 // pred_check_branch
      %11 = sbr.rel (0) target = $region5
    $region4: #{tpu_custom_call.1} parent=1 // pred_region
      %s13 = ssub.s32 256, 256
      %14 = vsyncadd [#allocation5], %s13
      %s16 = sshll.u32 [#allocation4], 4
      %s17 = int_to_ptr.vmem [resolvable:$true] %s16
      %19 = dma.hbm_to_vmem [thread:$0]  %s1, 256, %s17, [#allocation5]
    $region5: #{tpu_custom_call.1} parent=1 // pred_fallthru
      _
    // Predicated region
    $region6: #{tpu_custom_call.1} parent=1 // pred_check
      _
    $region7: #{tpu_custom_call.1} parent=1 // pred_check_branch
      %21 = sbr.rel (0) target = $region9
    $region8: #{tpu_custom_call.1} parent=1 // pred_region
      %22 = dma.done [#allocation5], 256
    $region9: #{tpu_custom_call.1} parent=1 // pred_fallthru
      _
    %s23 = smul.u32 0, 8
    %v24 = vlaneseq
    %v25 = vshrl.u32 %v24, 7
    %v26 = vstv %s23
    %v27 = vadd.s32 %v25, %v26
    %v28 = vlaneseq
    %v29 = vand.u32 %v28, 127
    %v30 = vmul.u32 %v27, 128
    %v31 = vadd.s32 %v30, %v29
    %s32 = sld [smem:[#allocation3]]
    %s33 = sadd.s32 %s32, 1
    %s34 = smul.u32 %s33, 2654435769
    %v35 = vmul.u32 %v31, 2
    %v36 = vstv %s34
    %v37 = vxor.u32 %v35, %v36
    %v38 = vshrl.u32 %v37, 16
    %v39 = vxor.u32 %v37, %v38
    %v40 = vmul.u32 %v39, 2146121005
    %v41 = vshrl.u32 %v40, 15
    %v42 = vxor.u32 %v40, %v41
    %v43 = vmul.u32 %v42, 2221713035
    %v44 = vshrl.u32 %v43, 16
    %v45 = vxor.u32 %v43, %v44
    %v46 = vadd.s32 %v35, 1
    %v47 = vxor.u32 %v46, %v36
    %v48 = vshrl.u32 %v47, 16
    %v49 = vxor.u32 %v47, %v48
    %v50 = vmul.u32 %v49, 2146121005
    %v51 = vshrl.u32 %v50, 15
    %v52 = vxor.u32 %v50, %v51
    %v53 = vmul.u32 %v52, 2221713035
    %v54 = vshrl.u32 %v53, 16
    %v55 = vxor.u32 %v53, %v54
    %v56 = vshrl.u32 %v45, 9
    %v57 = vcvt.s32.f32 %v56
    %v58 = vadd.f32 %v57, 0.5
    %v59 = vmul.f32 %v58, 1.1920929e-07
    %v60 = vshrl.u32 %v55, 9
    %v61 = vcvt.s32.f32 %v60
    %v62 = vmul.f32 %v61, 1.1920929e-07
    %v63 = vlog2.pop %v59
    %v64 = vmul.f32 %v63, 0.6931472
    %v65 = vmul.f32 %v64, -2.0
    %v66 = vrsqrt.pop %v65
    %v67 = vmul.f32 %v65, %v66
    %vm68 = vcmp.eq.f32.partialorder %v65, inf
    %v69 = vsel %vm68, %v65, %v67
    %vm70 = vcmp.eq.f32.partialorder %v65, 0.0
    %v71 = vand.u32 %v65, 2147483648
    %v72 = vsel %vm70, %v71, %v69
    %v73 = vmul.f32 %v62, 6.2831855
    %v74 = vand.u32 2147483647, %v73
    %vm75 = vcmp.le.f32.partialorder %v74, 0.7853982
    %vm76 = vcmp.lt.s32.totalorder %v73, 0
    %v77 = vand.u32 %v73, 2139095040
    %v78 = vshrl.u32 %v77, 23
    %v79 = vsub.s32 %v78, 127
    %v80 = vand.u32 2147483647, %v73
    %v81 = vand.u32 %v80, 8388607
    %v82 = vor.u32 %v81, 8388608
    %v83 = vsub.s32 0, %v82
    %v84 = vadd.s32 %v79, 1
    %vm85 = vcmp.gt.s32.totalorder %v84, 0
    %v86 = vsel %vm85, %v84, 0
    %v87 = vshrl.u32 %v86, 5
    %v88 = vand.u32 %v86, 31
    %v89 = vsub.s32 32, %v88
    %v90 = vshrl.u32 683565275, %v89
    %v91 = vshll.u32 683565275, %v88
    %v92 = vshrl.u32 2475754826, %v89
    %v93 = vor.u32 %v91, %v92
    %v94 = vshll.u32 2475754826, %v88
    %v95 = vshrl.u32 2131351028, %v89
    %v96 = vor.u32 %v94, %v95
    %v97 = vshll.u32 2131351028, %v88
    %v98 = vshrl.u32 2102212464, %v89
    %v99 = vor.u32 %v97, %v98
    %v100 = vshll.u32 2102212464, %v88
    %v101 = vshrl.u32 920167782, %v89
    %v102 = vor.u32 %v100, %v101
    %v103 = vshll.u32 920167782, %v88
    %v104 = vshrl.u32 1326507024, %v89
    %v105 = vor.u32 %v103, %v104
    %vm106 = vcmp.lt.s32.totalorder %v87, 1
    %vm107 = vcmp.lt.s32.totalorder %v87, 2
    %vm108 = vcmp.lt.s32.totalorder %v87, 3
    %vm109 = vcmp.lt.s32.totalorder %v87, 4
    %v110 = vsel %vm106, %v90, %v93
    %v111 = vsel %vm109, %v99, 2102212464
    %v112 = vsel %vm108, %v96, %v111
    %v113 = vsel %vm107, %v110, %v112
    %v114 = vsel %vm106, %v93, %v96
    %v115 = vsel %vm109, %v102, 920167782
    %v116 = vsel %vm108, %v99, %v115
    %v117 = vsel %vm107, %v114, %v116
    %v118 = vsel %vm106, %v96, %v99
    %v119 = vsel %vm109, %v105, 1326507024
    %v120 = vsel %vm108, %v102, %v119
    %v121 = vsel %vm107, %v118, %v120
    %v122 = vshll.u32 %v82, 8
    %v123 = vmul.u32.u64.compose %v122, %v121
    %v124 = vextract.low.u32 %v123
    %v125 = vextract.high.u32 %v123
    %v126 = vmul.u32.u64.compose %v122, %v117
    %v127 = vextract.low.u32 %v126
    %v128 = vextract.high.u32 %v126
    %v129 = vmul.u32 %v122, %v113
    %v130 = vadd.s32 %v125, %v127
    %vm131 = vc.u32 %v125, %v127
    %v132 = vadd.s32 %v128, 1
    %v133 = vsel %vm131, %v132, %v128
    %v134 = vadd.s32 %v129, %v133
    %v135 = vadd.s32 %v134, 536870912
    %v136 = vshrl.u32 %v135, 30
    %v137 = vshll.u32 %v136, 30
    %v138 = vsub.s32 %v134, %v137
    %vm139 = vcmp.lt.s32.totalorder %v138, 0
    %v140 = vsub.s32 0, %v138
    %v141 = vsel %vm139, %v140, %v138
    %v142 = vclz %v141
    %v143 = vsub.s32 %v142, 2
    %vm144 = vcmp.gt.s32.totalorder 0, %v143
    %v145 = vsel %vm144, 0, %v143
    %v146 = vsub.s32 32, %v145
    %v147 = vshll.u32 %v138, %v145
    %v148 = vshrl.u32 %v130, %v146
    %v149 = vor.u32 %v147, %v148
    %v150 = vsub.s32 4294967266, %v145
    %v151 = vadd.s32 %v150, 127
    %v152 = vshll.u32 %v151, 23
    %v153 = vor.u32 4788187, %v152
    %v154 = vand.u32 2147483647, %v153
    %v156 = vcvt.s32.f32 %v149
    %v157 = vmul.f32 %v156, %v154
    %v158 = vxor.u32 %v157, 2147483648
    %v159 = vsel %vm76, %v158, %v157
    %v160 = vsub.s32 4, %v136
    %v161 = vsel %vm76, %v160, %v136
    %v162 = vsel %vm75, %v73, %v159
    %v163 = vsel %vm75, 0, %v161
    %v164 = vcosq.f32.pop %v162
    %v165 = vsinq.f32.pop %v162
    %vm166 = vweird.f32 %v73
    %v167 = vand.u32 %v163, 3
    %vm168 = vcmp.lt.s32.totalorder %v167, 2
    %vm169 = vcmp.eq.s32.totalorder %v167, 0
    %v170 = vxor.u32 %v165, 2147483648
    %v171 = vsel %vm169, %v164, %v170
    %vm172 = vcmp.eq.s32.totalorder %v167, 2
    %v173 = vxor.u32 %v164, 2147483648
    %v174 = vsel %vm172, %v173, %v165
    %v175 = vsel %vm168, %v171, %v174
    %v176 = vsel %vm166, nan, %v175
    %v177 = vmul.f32 %v72, %v176
    %v178 = vand.u32 2147483647, %v73
    %vm179 = vcmp.le.f32.partialorder %v178, 0.7853982
    %vm180 = vcmp.lt.s32.totalorder %v73, 0
    %v181 = vand.u32 %v73, 2139095040
    %v182 = vshrl.u32 %v181, 23
    %v183 = vsub.s32 %v182, 127
    %v184 = vand.u32 2147483647, %v73
    %v185 = vand.u32 %v184, 8388607
    %v186 = vor.u32 %v185, 8388608
    %v187 = vsub.s32 0, %v186
    %v188 = vadd.s32 %v183, 1
    %vm189 = vcmp.gt.s32.totalorder %v188, 0
    %v190 = vsel %vm189, %v188, 0
    %v191 = vshrl.u32 %v190, 5
    %v192 = vand.u32 %v190, 31
    %v193 = vsub.s32 32, %v192
    %v194 = vshrl.u32 683565275, %v193
    %v195 = vshll.u32 683565275, %v192
    %v196 = vshrl.u32 2475754826, %v193
    %v197 = vor.u32 %v195, %v196
    %v198 = vshll.u32 2475754826, %v192
    %v199 = vshrl.u32 2131351028, %v193
    %v200 = vor.u32 %v198, %v199
    %v201 = vshll.u32 2131351028, %v192
    %v202 = vshrl.u32 2102212464, %v193
    %v203 = vor.u32 %v201, %v202
    %v204 = vshll.u32 2102212464, %v192
    %v205 = vshrl.u32 920167782, %v193
    %v206 = vor.u32 %v204, %v205
    %v207 = vshll.u32 920167782, %v192
    %v208 = vshrl.u32 1326507024, %v193
    %v209 = vor.u32 %v207, %v208
    %vm210 = vcmp.lt.s32.totalorder %v191, 1
    %vm211 = vcmp.lt.s32.totalorder %v191, 2
    %vm212 = vcmp.lt.s32.totalorder %v191, 3
    %vm213 = vcmp.lt.s32.totalorder %v191, 4
    %v214 = vsel %vm210, %v194, %v197
    %v215 = vsel %vm213, %v203, 2102212464
    %v216 = vsel %vm212, %v200, %v215
    %v217 = vsel %vm211, %v214, %v216
    %v218 = vsel %vm210, %v197, %v200
    %v219 = vsel %vm213, %v206, 920167782
    %v220 = vsel %vm212, %v203, %v219
    %v221 = vsel %vm211, %v218, %v220
    %v222 = vsel %vm210, %v200, %v203
    %v223 = vsel %vm213, %v209, 1326507024
    %v224 = vsel %vm212, %v206, %v223
    %v225 = vsel %vm211, %v222, %v224
    %v226 = vshll.u32 %v186, 8
    %v227 = vmul.u32.u64.compose %v226, %v225
    %v228 = vextract.low.u32 %v227
    %v229 = vextract.high.u32 %v227
    %v230 = vmul.u32.u64.compose %v226, %v221
    %v231 = vextract.low.u32 %v230
    %v232 = vextract.high.u32 %v230
    %v233 = vmul.u32 %v226, %v217
    %v234 = vadd.s32 %v229, %v231
    %vm235 = vc.u32 %v229, %v231
    %v236 = vadd.s32 %v232, 1
    %v237 = vsel %vm235, %v236, %v232
    %v238 = vadd.s32 %v233, %v237
    %v239 = vadd.s32 %v238, 536870912
    %v240 = vshrl.u32 %v239, 30
    %v241 = vshll.u32 %v240, 30
    %v242 = vsub.s32 %v238, %v241
    %vm243 = vcmp.lt.s32.totalorder %v242, 0
    %v244 = vsub.s32 0, %v242
    %v245 = vsel %vm243, %v244, %v242
    %v246 = vclz %v245
    %v247 = vsub.s32 %v246, 2
    %vm248 = vcmp.gt.s32.totalorder 0, %v247
    %v249 = vsel %vm248, 0, %v247
    %v250 = vsub.s32 32, %v249
    %v251 = vshll.u32 %v242, %v249
    %v252 = vshrl.u32 %v234, %v250
    %v253 = vor.u32 %v251, %v252
    %v254 = vsub.s32 4294967266, %v249
    %v255 = vadd.s32 %v254, 127
    %v256 = vshll.u32 %v255, 23
    %v257 = vor.u32 4788187, %v256
    %v258 = vand.u32 2147483647, %v257
    %v260 = vcvt.s32.f32 %v253
    %v261 = vmul.f32 %v260, %v258
    %v262 = vxor.u32 %v261, 2147483648
    %v263 = vsel %vm180, %v262, %v261
    %v264 = vsub.s32 4, %v240
    %v265 = vsel %vm180, %v264, %v240
    %v266 = vsel %vm179, %v73, %v263
    %v267 = vsel %vm179, 0, %v265
    %v268 = vcosq.f32.pop %v266
    %v269 = vsinq.f32.pop %v266
    %vm270 = vweird.f32 %v73
    %v271 = vadd.s32 %v267, 3
    %v272 = vand.u32 %v271, 3
    %vm273 = vcmp.lt.s32.totalorder %v272, 2
    %vm274 = vcmp.eq.s32.totalorder %v272, 0
    %v275 = vxor.u32 %v269, 2147483648
    %v276 = vsel %vm274, %v268, %v275
    %vm277 = vcmp.eq.s32.totalorder %v272, 2
    %v278 = vxor.u32 %v268, 2147483648
    %v279 = vsel %vm277, %v278, %v269
    %v280 = vsel %vm273, %v276, %v279
    %v281 = vsel %vm270, nan, %v280
    %v282 = vmul.f32 %v72, %v281
    %v283 = vmul.f32 %v177, 0.1
    %v284 = vmul.f32 %v282, 0.1
    %v285 = vadd.f32 %v283, 1.0
    %v286 = vadd.f32 %v284, 1.0
    %v287 = vld [vmem:[#allocation4] sm:$0xff]
    %v288 = vld [vmem:[#allocation4 + $0x8] sm:$0xff]
    %v289 = vmul.f32 %v287, %v285
    %v290 = vmul.f32 %v288, %v286
    %291 = vst [vmem:[#allocation7] sm:$0xff] %v289
    %292 = vst [vmem:[#allocation7 + $0x8] sm:$0xff] %v290
    // Predicated region
    $region10: #{tpu_custom_call.1} parent=1 // pred_check
      _
    $region11: #{tpu_custom_call.1} parent=1 // pred_check_branch
      %294 = sbr.rel (0) target = $region13
    $region12: #{tpu_custom_call.1} parent=1 // pred_region
      %s296 = ssub.s32 256, 256
      %297 = vsyncadd [#allocation6], %s296
      %s299 = sshll.u32 [#allocation7], 4
      %s300 = int_to_ptr.vmem [resolvable:$true] %s299
      %302 = dma.vmem_to_hbm [thread:$0]  %s300, 256, %s2, [#allocation6]
    $region13: #{tpu_custom_call.1} parent=1 // pred_fallthru
      _
    // Predicated region
    $region14: #{tpu_custom_call.1} parent=1 // pred_check
      _
    $region15: #{tpu_custom_call.1} parent=1 // pred_check_branch
      %304 = sbr.rel (0) target = $region17
    $region16: #{tpu_custom_call.1} parent=1 // pred_region
      %305 = dma.done [#allocation6], 256
    $region17: #{tpu_custom_call.1} parent=1 // pred_fallthru
      _
    %306 = vsyncpa [#allocation5], 1
    %307 = vsyncpa [#allocation6], 1

</llo_original>
